<compile_context>
chip_gen: v5e
topology: v5e:2x2
jax: 0.10.0
libtpu: 0.0.40
codegen_flags: <defaults>
</compile_context>

<pallas_src>
from functools import partial

import jax
import jax.numpy as jnp
from jax.experimental import pallas as pl
from jax.experimental.pallas import tpu as pltpu

TASK_NAME = "my_task"

LANES = 128  # TPU vreg lane width


def _cdiv(a, b):
    return -(-a // b)


def _round_up(a, b):
    return _cdiv(a, b) * b


def _pick_tile_r():
    """Packed-row tile size per TPU generation (review feedback).

    4096 packed rows = 8 MiB in + 2 MiB out per step (~20.5 MiB double-buffered):
    fine on v6e / v7x.  Elsewhere (v5e's 16 MiB default scoped VMEM) use 2048
    (~10.5 MiB double-buffered).
    """
    try:
        kind = jax.devices()[0].device_kind.lower()
    except Exception:
        return 2048
    if "v6" in kind or "v7" in kind:
        return 4096
    return 2048


TILE_R = _pick_tile_r()


def pack_weight(weight):
    """(1, D) linear weight -> (D*128, 128) block-diagonal MXU weight.

    W_bd[D*k + j, k] = w[j]; with the lane-dense packing
    x_packed[rr, D*k + j] = x[128*rr + k, j] this gives
    (x_packed @ W_bd)[rr, k] = x[128*rr + k, :] @ w.
    Built once (hoisted out of the per-call path per review feedback).
    """
    d = weight.shape[-1]
    return jnp.kron(jnp.eye(LANES, dtype=jnp.float32),
                    weight.reshape(d, 1).astype(jnp.float32))


def _linear_kernel(x_ref, w_ref, b_ref, o_ref):
    # x_ref: (TR, D*128) lane-dense packed rows (VMEM, pipelined)
    # w_ref: (D*128, 128) block-diagonal weight  (VMEM, resident)
    # b_ref: (1, 1) scalar bias                  (SMEM)
    # o_ref: (TR, 128) lane-dense output         (VMEM)
    acc = jnp.dot(x_ref[...], w_ref[...], preferred_element_type=jnp.float32)
    o_ref[...] = (acc + b_ref[0, 0]).astype(o_ref.dtype)


def _linear_bulk(x_aligned, w_packed, bias2d, tile_r):
    """Run the kernel on a 128-row-aligned slab.  Zero-copy: the (n, D)->(n/128, D*128)
    reshape is a free contiguous bitcast, the grid uses cdiv (no pad-to-tile), and
    Pallas masks the write-back of a partial last block."""
    n, d = x_aligned.shape
    pack = d * LANES
    r = n // LANES
    x_packed = x_aligned.reshape(r, pack)

    # Tile choice: biggest tile that fits the scoped-VMEM budget, but keep >= 2 grid
    # steps whenever possible so both v7x TensorCores get work.
    if r >= 2 * tile_r:
        tr = tile_r
    elif r >= 16:
        tr = _round_up(_cdiv(r, 2), 8)
    else:
        tr = r  # single full-extent block (legal for any r)

    grid = (_cdiv(r, tr),)

    # Explicit scoped-VMEM budget: double-buffered in/out tiles + weight + headroom.
    vmem_limit = 2 * (tr * pack + tr * LANES) * 4 + 2 * pack * LANES * 4 + (4 << 20)

    cost = pl.CostEstimate(
        flops=2 * r * pack * LANES,  # dense MXU work actually issued
        transcendentals=0,
        bytes_accessed=(r * pack + pack * LANES + r * LANES) * 4,
    )

    out_packed = pl.pallas_call(
        _linear_kernel,
        out_shape=jax.ShapeDtypeStruct((r, LANES), jnp.float32),
        grid_spec=pltpu.PrefetchScalarGridSpec(
            num_scalar_prefetch=0,
            grid=grid,
            in_specs=[
                pl.BlockSpec((tr, pack), lambda i: (i, 0)),          # x tile (pipelined)
                pl.BlockSpec((pack, LANES), lambda i: (0, 0)),       # weight (resident)
                pl.BlockSpec(memory_space=pltpu.MemorySpace.SMEM),   # scalar bias
            ],
            out_specs=pl.BlockSpec((tr, LANES), lambda i: (i, 0)),   # lane-dense output
        ),
        compiler_params=pltpu.CompilerParams(
            dimension_semantics=("parallel",),
            vmem_limit_bytes=int(vmem_limit),
        ),
        cost_estimate=cost,
    )(x_packed, w_packed, bias2d)

    # Row-major flatten restores the original row order; free under jit.
    return out_packed.reshape(n, 1)


def linear_pallas(x2d, weight, bias, w_packed=None, *, tile_r=TILE_R):
    """y = x2d @ weight.T + bias.   x2d: (N, D) -> (N, 1), all f32.

    Ragged N handling (review feedback): no full-array pad / output slice.  The
    aligned bulk goes through the Pallas kernel; the <128-row tail is a trivial
    XLA matvec concatenated on (4 B/row of extra output traffic only).
    """
    n, d = x2d.shape
    x2d = x2d.astype(jnp.float32)
    if w_packed is None:
        w_packed = pack_weight(weight)
    bias2d = bias.reshape(1, 1).astype(jnp.float32)

    tail = n % LANES
    bulk = n - tail

    if bulk == 0:
        # Tiny input (< 128 rows): pad a single 128-row group (negligible) so the
        # Pallas kernel still handles it, then drop the padded rows.
        x_pad = jnp.pad(x2d, ((0, LANES - n), (0, 0)))
        return _linear_bulk(x_pad, w_packed, bias2d, tile_r)[:n]

    # NOTE: when tail > 0 XLA may materialize the prefix slice feeding the custom
    # call; that is never worse than the old pad path and vanishes entirely for
    # 128-aligned N (the common large-batch case).
    out_bulk = _linear_bulk(x2d if tail == 0 else x2d[:bulk], w_packed, bias2d, tile_r)
    if tail == 0:
        return out_bulk

    out_tail = x2d[bulk:] @ weight.reshape(d, 1).astype(jnp.float32) + bias2d
    return jnp.concatenate([out_bulk, out_tail], axis=0)


@partial(jax.jit, static_argnames=("tile_r",))
def backbone_forward(graphs, weight, bias, w_packed, *, tile_r=TILE_R):
    orig_shape = graphs.shape
    d = orig_shape[-1]
    x2d = graphs.reshape(-1, d).astype(jnp.float32)
    out2d = linear_pallas(x2d, weight, bias, w_packed, tile_r=tile_r)
    return {TASK_NAME: out2d.reshape(*orig_shape[:-1], 1)}


class BackbonePallas:
    """JAX/Pallas port of the PyTorch Backbone module (Linear(input_dim, 1))."""

    def __init__(self, input_dim=4, key=jax.random.PRNGKey(42)):
        kw, kb = jax.random.split(key)
        # Deterministic init mirroring nn.Linear's uniform(-1/sqrt(fan_in), 1/sqrt(fan_in)).
        bound = 1.0 / jnp.sqrt(jnp.float32(input_dim))
        self.weight = jax.random.uniform(
            kw, (1, input_dim), minval=-bound, maxval=bound, dtype=jnp.float32
        )
        self.bias = jax.random.uniform(
            kb, (1,), minval=-bound, maxval=bound, dtype=jnp.float32
        )
        # Hoisted out of the per-call path (review feedback): built once here.
        self.w_packed = pack_weight(self.weight)

    def __call__(self, graphs):
        return backbone_forward(graphs, self.weight, self.bias, self.w_packed)


if __name__ == "__main__":
    model = BackbonePallas(input_dim=4)

    # Primary example matching the module: batch of 2 graphs, 8 nodes, 4 features.
    graphs = jax.random.normal(jax.random.PRNGKey(0), (2, 8, 4), dtype=jnp.float32)
    out = jax.block_until_ready(model(graphs)[TASK_NAME])
    ref = graphs @ model.weight.T + model.bias
    assert out.shape == (2, 8, 1), out.shape
    assert jnp.allclose(out, ref, atol=1e-5), "mismatch vs reference (small)"

    # Secondary check: large ragged N -> multi-step grid, Pallas-masked partial last
    # block, pad-free bulk/tail split, and the <128-row plain-XLA tail path.
    x_big = jax.random.normal(jax.random.PRNGKey(1), (3037, 4), dtype=jnp.float32)
    big_fn = jax.jit(lambda x: linear_pallas(x, model.weight, model.bias, model.w_packed))
    out_big = jax.block_until_ready(big_fn(x_big))
    ref_big = x_big @ model.weight.T + model.bias
    assert out_big.shape == (3037, 1), out_big.shape
    assert jnp.allclose(out_big, ref_big, atol=1e-5), "mismatch vs reference (ragged)"

    # Tertiary check: force many full tiles + a partial last block via a tiny tile.
    out_tiled = jax.block_until_ready(
        linear_pallas(x_big, model.weight, model.bias, model.w_packed, tile_r=8)
    )
    assert jnp.allclose(out_tiled, ref_big, atol=1e-5), "mismatch vs reference (tiled)"

    print("KERNEL_OK")
</pallas_src>

<mosaic_0001>
module attributes {stable_mosaic.version = 11 : i64} {
  func.func @_linear_kernel(%arg0: i32, %arg1: memref<1x512xf32, #tpu.memory_space<vmem>>, %arg2: memref<512x128xf32, #tpu.memory_space<vmem>>, %arg3: memref<1x1xf32, #tpu.memory_space<smem>>, %arg4: memref<1x128xf32, #tpu.memory_space<vmem>>) attributes {dimension_semantics = [#tpu.dimension_semantics<parallel>], iteration_bounds = array<i64: 1>, scalar_prefetch = 0 : i64, scratch_operands = 0 : i64, tpu.core_type = #tpu.core_type<tc>, window_params = [{transform_indices = @transform_0, window_bounds = array<i64: 1, 512>}, {pipeline_mode = #tpu.pipeline_mode<synchronous>, transform_indices = @transform_1, window_bounds = array<i64: 512, 128>}, {transform_indices = @transform_2, window_bounds = array<i64: 1, 1>}, {transform_indices = @transform_3, window_bounds = array<i64: 1, 128>}]} {
    %c0 = arith.constant 0 : index
    %c0_0 = arith.constant 0 : index
    %0 = vector.load %arg1[%c0, %c0_0] : memref<1x512xf32, #tpu.memory_space<vmem>>, vector<1x512xf32>
    %c0_1 = arith.constant 0 : index
    %c0_2 = arith.constant 0 : index
    %1 = vector.load %arg2[%c0_1, %c0_2] : memref<512x128xf32, #tpu.memory_space<vmem>>, vector<512x128xf32>
    %cst = arith.constant dense<0.000000e+00> : vector<1x128xf32>
    %2 = tpu.matmul %0, %1, %cst {dimension_numbers = #tpu.dot_dimension_numbers<[1], [0], [0], [1], [0, 0, 1, 1], [], []>} : vector<1x512xf32>, vector<512x128xf32>, vector<1x128xf32> -> vector<1x128xf32>
    %c0_3 = arith.constant 0 : index
    %c0_4 = arith.constant 0 : index
    %3 = memref.load %arg3[%c0_3, %c0_4] : memref<1x1xf32, #tpu.memory_space<smem>>
    %4 = vector.broadcast %3 : f32 to vector<1x128xf32>
    %5 = arith.addf %2, %4 : vector<1x128xf32>
    %c0_5 = arith.constant 0 : index
    %c0_6 = arith.constant 0 : index
    %6 = vector.load %arg4[%c0_5, %c0_6] : memref<1x128xf32, #tpu.memory_space<vmem>>, vector<1x128xf32>
    tpu.vector_store %arg4[%c0_5, %c0_6], %5 {strides = array<i32>} : memref<1x128xf32, #tpu.memory_space<vmem>>, vector<1x128xf32>,
    return
  }
  func.func @transform_0(%arg0: i32) -> (i32, i32) {
    %c0_i32 = arith.constant 0 : i32
    %c0_i32_0 = arith.constant 0 : i32
    return %arg0, %c0_i32 : i32, i32
  }
  func.func @transform_1(%arg0: i32) -> (i32, i32) {
    %c0_i32 = arith.constant 0 : i32
    %c0_i32_0 = arith.constant 0 : i32
    %c0_i32_1 = arith.constant 0 : i32
    return %c0_i32, %c0_i32_0 : i32, i32
  }
  func.func @transform_2(%arg0: i32) -> (i32, i32) {
    %c0_i32 = arith.constant 0 : i32
    %c0_i32_0 = arith.constant 0 : i32
    %c0_i32_1 = arith.constant 0 : i32
    return %c0_i32, %c0_i32_0 : i32, i32
  }
  func.func @transform_3(%arg0: i32) -> (i32, i32) {
    %c0_i32 = arith.constant 0 : i32
    %c0_i32_0 = arith.constant 0 : i32
    return %arg0, %c0_i32 : i32, i32
  }
}

</mosaic_0001>

<llo_original>
// kernel: backbone_forward.1
$region0: #{backbone_forward.1}
  #allocation0 [shape = 'u32[]', space=smem, size = 0x4, offset = 0x4, fixed_abs, tag = 'smem constant byte address 0x4 - core index']
  #allocation1 [shape = 'u32[72,128]{1,0:T(1,128)}', space=vmem, size = 0x9000, scoped, tag = 'internal scratch']
  #allocation2 [shape = 'f32[1,1]{1,0:T(1,128)S(6)}', space=smem, size = 0x200, scoped, tag = 'scoped memory for backbone_forward.1']
  %s0 = inlined_call_operand.vmem [shape: f32[1,512], index: 0, kind: input, shape index: {}]
  %s1 = inlined_call_operand.hbm [shape: f32[512,128], index: 1, kind: input, shape index: {}]
  %s2 = inlined_call_operand.<no memory space> [shape: f32[1,1], index: 2, kind: input, shape index: {}]
  %s3 = inlined_call_operand.vmem [shape: f32[1,128], index: 3, kind: output, shape index: {}]
  %s4 = sld [smem:[#allocation0]]
  $region26: #{backbone_forward.1} parent=0
    _
  %s6 = ssub.s32 1, %s4
  %s7 = scalar_select 0, %s6, %s4
  %8 = sst [smem:[#allocation2]] %s2
  $region1: #{backbone_forward.1} parent=0
    #allocation3 [shape = 'u8[262144]{0}', space=vmem, size = 0x40000, scoped, tag = 'input window, operand 1, single buffered']
    #allocation4 [shape = 's32[1]{0}', space=sflag, size = 0x4, scoped, tag = 'scoped memory for backbone_forward.1']
    %9 = vsyncpa [#allocation4], 0
    // Predicated region
    $region2: #{backbone_forward.1} parent=1 // pred_check
      _
    $region3: #{backbone_forward.1} parent=1 // pred_check_branch
      %11 = sbr.rel (0) target = $region5
    $region4: #{backbone_forward.1} parent=1 // pred_region
      _
    $region5: #{backbone_forward.1} parent=1 // pred_fallthru
      _
    // Predicated region
    $region6: #{backbone_forward.1} parent=1 // pred_check
      _
    $region7: #{backbone_forward.1} parent=1 // pred_check_branch
      %13 = sbr.rel (0) target = $region9
    $region8: #{backbone_forward.1} parent=1 // pred_region
      %15 = vsyncadd [#allocation4], 0
      %s16 = sshll.u32 %s1, 4
      %s17 = int_to_ptr.hbm [resolvable:$true] %s16
      %s18 = sshll.u32 [#allocation3], 4
      %s19 = int_to_ptr.vmem [resolvable:$true] %s18
      %24 = dma.hbm_to_vmem [thread:$0]  %s17, 8192, %s19, [#allocation4], 128, 128, 8
    $region9: #{backbone_forward.1} parent=1 // pred_fallthru
      _
    // Predicated region
    $region10: #{backbone_forward.1} parent=1 // pred_check
      _
    $region11: #{backbone_forward.1} parent=1 // pred_check_branch
      %26 = sbr.rel (0) target = $region13
    $region12: #{backbone_forward.1} parent=1 // pred_region
      _
    $region13: #{backbone_forward.1} parent=1 // pred_fallthru
      _
    // Predicated region
    $region14: #{backbone_forward.1} parent=1 // pred_check
      _
    $region15: #{backbone_forward.1} parent=1 // pred_check_branch
      %28 = sbr.rel (0) target = $region17
    $region16: #{backbone_forward.1} parent=1 // pred_region
      %30 = dma.done [#allocation4], 8192
    $region17: #{backbone_forward.1} parent=1 // pred_fallthru
      _
    %v31 = vld [vmem:[%s0] sm:$0xf]
    %v32 = vld [vmem:[#allocation3] sm:$0xff]
    %v33 = vld [vmem:[#allocation3 + $0x8] sm:$0xff]
    %v34 = vld [vmem:[#allocation3 + $0x10] sm:$0xff]
    %v35 = vld [vmem:[#allocation3 + $0x18] sm:$0xff]
    %v36 = vld [vmem:[#allocation3 + $0x20] sm:$0xff]
    %v37 = vld [vmem:[#allocation3 + $0x28] sm:$0xff]
    %v38 = vld [vmem:[#allocation3 + $0x30] sm:$0xff]
    %v39 = vld [vmem:[#allocation3 + $0x38] sm:$0xff]
    %v40 = vld [vmem:[#allocation3 + $0x40] sm:$0xff]
    %v41 = vld [vmem:[#allocation3 + $0x48] sm:$0xff]
    %v42 = vld [vmem:[#allocation3 + $0x50] sm:$0xff]
    %v43 = vld [vmem:[#allocation3 + $0x58] sm:$0xff]
    %v44 = vld [vmem:[#allocation3 + $0x60] sm:$0xff]
    %v45 = vld [vmem:[#allocation3 + $0x68] sm:$0xff]
    %v46 = vld [vmem:[#allocation3 + $0x70] sm:$0xff]
    %v47 = vld [vmem:[#allocation3 + $0x78] sm:$0xff]
    %v48 = vld [vmem:[#allocation3 + $0x80] sm:$0xff]
    %v49 = vld [vmem:[#allocation3 + $0x88] sm:$0xff]
    %v50 = vld [vmem:[#allocation3 + $0x90] sm:$0xff]
    %v51 = vld [vmem:[#allocation3 + $0x98] sm:$0xff]
    %v52 = vld [vmem:[#allocation3 + $0xa0] sm:$0xff]
    %v53 = vld [vmem:[#allocation3 + $0xa8] sm:$0xff]
    %v54 = vld [vmem:[#allocation3 + $0xb0] sm:$0xff]
    %v55 = vld [vmem:[#allocation3 + $0xb8] sm:$0xff]
    %v56 = vld [vmem:[#allocation3 + $0xc0] sm:$0xff]
    %v57 = vld [vmem:[#allocation3 + $0xc8] sm:$0xff]
    %v58 = vld [vmem:[#allocation3 + $0xd0] sm:$0xff]
    %v59 = vld [vmem:[#allocation3 + $0xd8] sm:$0xff]
    %v60 = vld [vmem:[#allocation3 + $0xe0] sm:$0xff]
    %v61 = vld [vmem:[#allocation3 + $0xe8] sm:$0xff]
    %v62 = vld [vmem:[#allocation3 + $0xf0] sm:$0xff]
    %v63 = vld [vmem:[#allocation3 + $0xf8] sm:$0xff]
    %v64 = vld [vmem:[#allocation3 + $0x100] sm:$0xff]
    %v65 = vld [vmem:[#allocation3 + $0x108] sm:$0xff]
    %v66 = vld [vmem:[#allocation3 + $0x110] sm:$0xff]
    %v67 = vld [vmem:[#allocation3 + $0x118] sm:$0xff]
    %v68 = vld [vmem:[#allocation3 + $0x120] sm:$0xff]
    %v69 = vld [vmem:[#allocation3 + $0x128] sm:$0xff]
    %v70 = vld [vmem:[#allocation3 + $0x130] sm:$0xff]
    %v71 = vld [vmem:[#allocation3 + $0x138] sm:$0xff]
    %v72 = vld [vmem:[#allocation3 + $0x140] sm:$0xff]
    %v73 = vld [vmem:[#allocation3 + $0x148] sm:$0xff]
    %v74 = vld [vmem:[#allocation3 + $0x150] sm:$0xff]
    %v75 = vld [vmem:[#allocation3 + $0x158] sm:$0xff]
    %v76 = vld [vmem:[#allocation3 + $0x160] sm:$0xff]
    %v77 = vld [vmem:[#allocation3 + $0x168] sm:$0xff]
    %v78 = vld [vmem:[#allocation3 + $0x170] sm:$0xff]
    %v79 = vld [vmem:[#allocation3 + $0x178] sm:$0xff]
    %v80 = vld [vmem:[#allocation3 + $0x180] sm:$0xff]
    %v81 = vld [vmem:[#allocation3 + $0x188] sm:$0xff]
    %v82 = vld [vmem:[#allocation3 + $0x190] sm:$0xff]
    %v83 = vld [vmem:[#allocation3 + $0x198] sm:$0xff]
    %v84 = vld [vmem:[#allocation3 + $0x1a0] sm:$0xff]
    %v85 = vld [vmem:[#allocation3 + $0x1a8] sm:$0xff]
    %v86 = vld [vmem:[#allocation3 + $0x1b0] sm:$0xff]
    %v87 = vld [vmem:[#allocation3 + $0x1b8] sm:$0xff]
    %v88 = vld [vmem:[#allocation3 + $0x1c0] sm:$0xff]
    %v89 = vld [vmem:[#allocation3 + $0x1c8] sm:$0xff]
    %v90 = vld [vmem:[#allocation3 + $0x1d0] sm:$0xff]
    %v91 = vld [vmem:[#allocation3 + $0x1d8] sm:$0xff]
    %v92 = vld [vmem:[#allocation3 + $0x1e0] sm:$0xff]
    %v93 = vld [vmem:[#allocation3 + $0x1e8] sm:$0xff]
    %v94 = vld [vmem:[#allocation3 + $0x1f0] sm:$0xff]
    %v95 = vld [vmem:[#allocation3 + $0x1f8] sm:$0xff]
    %s96 = sld [smem:[#allocation2]]
    %v97 = vstv %s96
    %v99 = vperm.slane %v31, 0
    %v100 = vperm.slane %v31, 1
    %v101 = vperm.slane %v31, 2
    %v102 = vperm.slane %v31, 3
    %107 = vmatpush.msra.mxu0 %v47
    %108 = vmatpush.msra.mxu0 %v46
    %109 = vmatpush.msra.mxu0 %v45
    %110 = vmatpush.msra.mxu0 %v44
    %111 = vmatpush.msra.mxu0 %v43
    %112 = vmatpush.msra.mxu0 %v42
    %113 = vmatpush.msra.mxu0 %v41
    %114 = vmatpush.msra.mxu0 %v40
    %115 = vmatpush.msra.mxu0 %v39
    %116 = vmatpush.msra.mxu0 %v38
    %117 = vmatpush.msra.mxu0 %v37
    %118 = vmatpush.msra.mxu0 %v36
    %119 = vmatpush.msra.mxu0 %v35
    %120 = vmatpush.msra.mxu0 %v34
    %121 = vmatpush.msra.mxu0 %v33
    %122 = vmatpush.msra.mxu0 %v32
    %123 = vmatmul.f32.gmra.mxu0 %v99
    %v124 = vpop.f32.mrf.mxu0
    %v125 = vadd.f32 %v97, %v124
    %126 = vdwg.mxu0
    %127 = vmatpush.msra.mxu0 %v63
    %128 = vmatpush.msra.mxu0 %v62
    %129 = vmatpush.msra.mxu0 %v61
    %130 = vmatpush.msra.mxu0 %v60
    %131 = vmatpush.msra.mxu0 %v59
    %132 = vmatpush.msra.mxu0 %v58
    %133 = vmatpush.msra.mxu0 %v57
    %134 = vmatpush.msra.mxu0 %v56
    %135 = vmatpush.msra.mxu0 %v55
    %136 = vmatpush.msra.mxu0 %v54
    %137 = vmatpush.msra.mxu0 %v53
    %138 = vmatpush.msra.mxu0 %v52
    %139 = vmatpush.msra.mxu0 %v51
    %140 = vmatpush.msra.mxu0 %v50
    %141 = vmatpush.msra.mxu0 %v49
    %142 = vmatpush.msra.mxu0 %v48
    %143 = vmatmul.f32.gmra.mxu0 %v100
    %v144 = vpop.f32.mrf.mxu0
    %v145 = vadd.f32 %v125, %v144
    %146 = vdwg.mxu0
    %147 = vmatpush.msra.mxu0 %v79
    %148 = vmatpush.msra.mxu0 %v78
    %149 = vmatpush.msra.mxu0 %v77
    %150 = vmatpush.msra.mxu0 %v76
    %151 = vmatpush.msra.mxu0 %v75
    %152 = vmatpush.msra.mxu0 %v74
    %153 = vmatpush.msra.mxu0 %v73
    %154 = vmatpush.msra.mxu0 %v72
    %155 = vmatpush.msra.mxu0 %v71
    %156 = vmatpush.msra.mxu0 %v70
    %157 = vmatpush.msra.mxu0 %v69
    %158 = vmatpush.msra.mxu0 %v68
    %159 = vmatpush.msra.mxu0 %v67
    %160 = vmatpush.msra.mxu0 %v66
    %161 = vmatpush.msra.mxu0 %v65
    %162 = vmatpush.msra.mxu0 %v64
    %163 = vmatmul.f32.gmra.mxu0 %v101
    %v164 = vpop.f32.mrf.mxu0
    %v165 = vadd.f32 %v145, %v164
    %166 = vdwg.mxu0
    %167 = vmatpush.msra.mxu0 %v95
    %168 = vmatpush.msra.mxu0 %v94
    %169 = vmatpush.msra.mxu0 %v93
    %170 = vmatpush.msra.mxu0 %v92
    %171 = vmatpush.msra.mxu0 %v91
    %172 = vmatpush.msra.mxu0 %v90
    %173 = vmatpush.msra.mxu0 %v89
    %174 = vmatpush.msra.mxu0 %v88
    %175 = vmatpush.msra.mxu0 %v87
    %176 = vmatpush.msra.mxu0 %v86
    %177 = vmatpush.msra.mxu0 %v85
    %178 = vmatpush.msra.mxu0 %v84
    %179 = vmatpush.msra.mxu0 %v83
    %180 = vmatpush.msra.mxu0 %v82
    %181 = vmatpush.msra.mxu0 %v81
    %182 = vmatpush.msra.mxu0 %v80
    %183 = vmatmul.f32.gmra.mxu0 %v102
    %v184 = vpop.f32.mrf.mxu0
    %v185 = vadd.f32 %v165, %v184
    %186 = vdwg.mxu0
    %187 = vst [vmem:[%s3] sm:$0x1] %v185
    // Predicated region
    $region18: #{backbone_forward.1} parent=1 // pred_check
      _
    $region19: #{backbone_forward.1} parent=1 // pred_check_branch
      %189 = sbr.rel (0) target = $region21
    $region20: #{backbone_forward.1} parent=1 // pred_region
      _
    $region21: #{backbone_forward.1} parent=1 // pred_fallthru
      _
    // Predicated region
    $region22: #{backbone_forward.1} parent=1 // pred_check
      _
    $region23: #{backbone_forward.1} parent=1 // pred_check_branch
      %191 = sbr.rel (0) target = $region25
    $region24: #{backbone_forward.1} parent=1 // pred_region
      _
    $region25: #{backbone_forward.1} parent=1 // pred_fallthru
      _
    %192 = vsyncpa [#allocation4], 1

</llo_original>
